<compile_context>
chip_gen: v7x
topology: tpu7x:2x2x1
jax: 0.10.0
libtpu: 0.0.40
codegen_flags: <defaults>
</compile_context>

<pallas_src>
import jax
import jax.numpy as jnp
import numpy as np
from jax import lax
from jax.experimental import pallas as pl
from jax.experimental.pallas import tpu as pltpu


P = 8              # samples packed per 128-lane row (8 * 16 input elements = 128 lanes)
MAX_TILE_R = 1024  # packed rows per grid step (= 8192 samples, ~1.5 MiB VMEM / step)


# ---------------------------------------------------------------------------
# Kernel
# ---------------------------------------------------------------------------
def _debugnet1_kernel(w1_ref, x_ref, m2_ref, m3_ref, o_ref):
    # w1_ref: SMEM (1,)            -- 1x1 conv weight (scalar)
    # x_ref : VMEM (TILE_R, 128)   -- 8 flattened 4x4 samples per row
    # m2_ref: VMEM (128, 144)      -- block-diagonal conv2 matrix (8 x (16,18))
    # m3_ref: VMEM (144, 24)       -- block-diagonal conv3 matrix (8 x (18,3))
    # o_ref : VMEM (TILE_R, 24)    -- 8 x 3 outputs per row
    w1 = w1_ref[0]
    h1 = jnp.maximum(x_ref[...] * w1, 0.0)                                   # conv1 + relu
    h2 = jnp.dot(h1, m2_ref[...], preferred_element_type=jnp.float32)        # conv2
    h2 = jnp.maximum(h2, 0.0)                                                # relu
    h3 = jnp.dot(h2, m3_ref[...], preferred_element_type=jnp.float32)        # conv3
    o_ref[...] = jnp.maximum(h3, 0.0)                                        # relu


# ---------------------------------------------------------------------------
# Host-side matrix construction (fixed module weights)
# ---------------------------------------------------------------------------
def _conv2_matrix():
    """(16, 18): flattened 4x4 input -> flattened (2, 3, 3) conv2 output (NCHW order)."""
    w2 = np.arange(2 * 1 * 2 * 2, dtype=np.float32).reshape(2, 1, 2, 2)
    m = np.zeros((16, 18), dtype=np.float32)
    for c in range(2):
        for oi in range(3):
            for oj in range(3):
                for ki in range(2):
                    for kj in range(2):
                        m[(oi + ki) * 4 + (oj + kj), c * 9 + oi * 3 + oj] += w2[c, 0, ki, kj]
    return m


def _conv3_matrix():
    """(18, 3): flattened (2, 3, 3) input -> 3 conv3 output channels (1x1 spatial)."""
    w3 = np.arange(3 * 2 * 3 * 3, dtype=np.float32).reshape(3, 2, 3, 3)
    m = np.zeros((18, 3), dtype=np.float32)
    for oc in range(3):
        for ic in range(2):
            for ki in range(3):
                for kj in range(3):
                    m[ic * 9 + ki * 3 + kj, oc] += w3[oc, ic, ki, kj]
    return m


def _block_diag(m, p):
    r, c = m.shape
    out = np.zeros((p * r, p * c), dtype=m.dtype)
    for k in range(p):
        out[k * r:(k + 1) * r, k * c:(k + 1) * c] = m
    return out


# ---------------------------------------------------------------------------
# Wrapper
# ---------------------------------------------------------------------------
def debugnet1_forward(x):
    """x: (N, 1, 4, 4) float32.  Returns (N, 3) float32 (== PyTorch .view(-1, 3))."""
    N = x.shape[0]
    assert x.shape[1] == 1 and x.shape[2] == 4 and x.shape[3] == 4

    # Module parameters (deterministic, from __init__).
    w1 = jnp.ones((1,), dtype=jnp.float32)                       # conv1.weight[...] = 1.0
    m2_blk = jnp.asarray(_block_diag(_conv2_matrix(), P))        # (128, 144)
    m3_blk = jnp.asarray(_block_diag(_conv3_matrix(), P))        # (144, 24)

    # --- lane-dense packing: 8 samples per 128-lane row, padded to whole tiles ---
    rows = -(-N // P)                       # packed rows needed
    rows8 = -(-rows // 8) * 8               # sublane-aligned
    tile_r = min(MAX_TILE_R, rows8)         # rows per grid step (multiple of 8)
    rows_pad = -(-rows8 // tile_r) * tile_r # whole number of tiles -> no ragged blocks
    n_pad = rows_pad * P

    x_flat = x.reshape(N, 16).astype(jnp.float32)
    if n_pad != N:
        x_flat = jnp.pad(x_flat, ((0, n_pad - N), (0, 0)))       # zero rows -> zero outputs
    x_packed = x_flat.reshape(rows_pad, P * 16)                  # (rows_pad, 128)

    grid = (rows_pad // tile_r,)
    flops = 2 * rows_pad * (128 * 144 + 144 * 24)
    bytes_accessed = rows_pad * (128 + 24) * 4 + (128 * 144 + 144 * 24 + 1) * 4

    out_packed = pl.pallas_call(
        _debugnet1_kernel,
        out_shape=jax.ShapeDtypeStruct((rows_pad, P * 3), jnp.float32),
        grid=grid,
        in_specs=[
            pl.BlockSpec(memory_space=pltpu.SMEM),                   # w1 scalar
            pl.BlockSpec((tile_r, P * 16), lambda i: (i, 0)),        # packed input rows
            pl.BlockSpec((P * 16, P * 18), lambda i: (0, 0)),        # conv2 block-diag matrix
            pl.BlockSpec((P * 18, P * 3), lambda i: (0, 0)),         # conv3 block-diag matrix
        ],
        out_specs=pl.BlockSpec((tile_r, P * 3), lambda i: (i, 0)),   # packed output rows
        compiler_params=pltpu.CompilerParams(
            dimension_semantics=("parallel",),                        # megacore split on v7x
        ),
        cost_estimate=pl.CostEstimate(
            flops=flops, transcendentals=0, bytes_accessed=bytes_accessed),
    )(w1, x_packed, m2_blk, m3_blk)

    # Unpack: (rows_pad, 24) -> (n_pad, 3) is a contiguous reshape; drop padding rows.
    return out_packed.reshape(n_pad, 3)[:N]


# ---------------------------------------------------------------------------
# Pure-JAX reference (independent of the matrix construction above)
# ---------------------------------------------------------------------------
def _reference(x):
    w1 = jnp.ones((1, 1, 1, 1), dtype=jnp.float32)
    w2 = jnp.arange(2 * 1 * 2 * 2, dtype=jnp.float32).reshape(2, 1, 2, 2)
    w3 = jnp.arange(3 * 2 * 3 * 3, dtype=jnp.float32).reshape(3, 2, 3, 3)
    dn = ("NCHW", "OIHW", "NCHW")
    h = jax.nn.relu(lax.conv_general_dilated(x, w1, (1, 1), "VALID", dimension_numbers=dn))
    h = jax.nn.relu(lax.conv_general_dilated(h, w2, (1, 1), "VALID", dimension_numbers=dn))
    h = jax.nn.relu(lax.conv_general_dilated(h, w3, (1, 1), "VALID", dimension_numbers=dn))
    return h.reshape(-1, 3)


if __name__ == "__main__":
    key = jax.random.PRNGKey(0)
    x = jax.random.normal(key, (2, 1, 4, 4), dtype=jnp.float32)   # N=2 -> output (2, 3)

    out = debugnet1_forward(x)
    out = jax.block_until_ready(out)

    ref = _reference(x)
    assert out.shape == (2, 3), out.shape
    np.testing.assert_allclose(np.asarray(out), np.asarray(ref), rtol=1e-4, atol=1e-4)
    print("KERNEL_OK")
</pallas_src>

<mosaic_0001>
module attributes {stable_mosaic.version = 11 : i64} {
  func.func @_debugnet1_kernel(%arg0: i32, %arg1: memref<1xf32, #tpu.memory_space<smem>>, %arg2: memref<8x128xf32, #tpu.memory_space<vmem>>, %arg3: memref<128x144xf32, #tpu.memory_space<vmem>>, %arg4: memref<144x24xf32, #tpu.memory_space<vmem>>, %arg5: memref<8x24xf32, #tpu.memory_space<vmem>>) attributes {dimension_semantics = [#tpu.dimension_semantics<parallel>], iteration_bounds = array<i64: 1>, scalar_prefetch = 0 : i64, scratch_operands = 0 : i64, tpu.core_type = #tpu.core_type<tc>, window_params = [{transform_indices = @transform_0, window_bounds = array<i64: 1>}, {transform_indices = @transform_1, window_bounds = array<i64: 8, 128>}, {pipeline_mode = #tpu.pipeline_mode<synchronous>, transform_indices = @transform_2, window_bounds = array<i64: 128, 144>}, {pipeline_mode = #tpu.pipeline_mode<synchronous>, transform_indices = @transform_3, window_bounds = array<i64: 144, 24>}, {transform_indices = @transform_4, window_bounds = array<i64: 8, 24>}]} {
    %c0 = arith.constant 0 : index
    %0 = memref.load %arg1[%c0] : memref<1xf32, #tpu.memory_space<smem>>
    %c0_0 = arith.constant 0 : index
    %c0_1 = arith.constant 0 : index
    %1 = vector.load %arg2[%c0_0, %c0_1] : memref<8x128xf32, #tpu.memory_space<vmem>>, vector<8x128xf32>
    %2 = vector.broadcast %0 : f32 to vector<8x128xf32>
    %3 = arith.mulf %1, %2 : vector<8x128xf32>
    %cst = arith.constant 0.000000e+00 : f32
    %4 = vector.broadcast %cst : f32 to vector<8x128xf32>
    %5 = arith.maximumf %3, %4 : vector<8x128xf32>
    %c0_2 = arith.constant 0 : index
    %c0_3 = arith.constant 0 : index
    %6 = vector.load %arg3[%c0_2, %c0_3] : memref<128x144xf32, #tpu.memory_space<vmem>>, vector<128x144xf32>
    %cst_4 = arith.constant dense<0.000000e+00> : vector<8x144xf32>
    %7 = tpu.matmul %5, %6, %cst_4 {dimension_numbers = #tpu.dot_dimension_numbers<[1], [0], [0], [1], [0, 0, 1, 1], [], []>} : vector<8x128xf32>, vector<128x144xf32>, vector<8x144xf32> -> vector<8x144xf32>
    %cst_5 = arith.constant 0.000000e+00 : f32
    %8 = vector.broadcast %cst_5 : f32 to vector<8x144xf32>
    %9 = arith.maximumf %7, %8 : vector<8x144xf32>
    %c0_6 = arith.constant 0 : index
    %c0_7 = arith.constant 0 : index
    %10 = vector.load %arg4[%c0_6, %c0_7] : memref<144x24xf32, #tpu.memory_space<vmem>>, vector<144x24xf32>
    %cst_8 = arith.constant dense<0.000000e+00> : vector<8x24xf32>
    %11 = tpu.matmul %9, %10, %cst_8 {dimension_numbers = #tpu.dot_dimension_numbers<[1], [0], [0], [1], [0, 0, 1, 1], [], []>} : vector<8x144xf32>, vector<144x24xf32>, vector<8x24xf32> -> vector<8x24xf32>
    %cst_9 = arith.constant 0.000000e+00 : f32
    %12 = vector.broadcast %cst_9 : f32 to vector<8x24xf32>
    %13 = arith.maximumf %11, %12 : vector<8x24xf32>
    %c0_10 = arith.constant 0 : index
    %c0_11 = arith.constant 0 : index
    %14 = vector.load %arg5[%c0_10, %c0_11] : memref<8x24xf32, #tpu.memory_space<vmem>>, vector<8x24xf32>
    tpu.vector_store %arg5[%c0_10, %c0_11], %13 {strides = array<i32>} : memref<8x24xf32, #tpu.memory_space<vmem>>, vector<8x24xf32>,
    return
  }
  func.func @transform_0(%arg0: i32) -> i32 {
    %c0_i32 = arith.constant 0 : i32
    %c0_i32_0 = arith.constant 0 : i32
    return %c0_i32 : i32
  }
  func.func @transform_1(%arg0: i32) -> (i32, i32) {
    %c0_i32 = arith.constant 0 : i32
    %c0_i32_0 = arith.constant 0 : i32
    return %arg0, %c0_i32 : i32, i32
  }
  func.func @transform_2(%arg0: i32) -> (i32, i32) {
    %c0_i32 = arith.constant 0 : i32
    %c0_i32_0 = arith.constant 0 : i32
    %c0_i32_1 = arith.constant 0 : i32
    return %c0_i32, %c0_i32_0 : i32, i32
  }
  func.func @transform_3(%arg0: i32) -> (i32, i32) {
    %c0_i32 = arith.constant 0 : i32
    %c0_i32_0 = arith.constant 0 : i32
    %c0_i32_1 = arith.constant 0 : i32
    return %c0_i32, %c0_i32_0 : i32, i32
  }
  func.func @transform_4(%arg0: i32) -> (i32, i32) {
    %c0_i32 = arith.constant 0 : i32
    %c0_i32_0 = arith.constant 0 : i32
    return %arg0, %c0_i32 : i32, i32
  }
}

</mosaic_0001>

<llo_original>
// kernel: tpu_custom_call.1
$region0: #{tpu_custom_call.1}
  #allocation0 [shape = 'u32[]', space=smem, size = 0x4, offset = 0x4, fixed_abs, tag = 'smem constant byte address 0x4 - core index']
  #allocation1 [shape = 'u32[144,128]{1,0:T(1,128)}', space=vmem, size = 0x12000, scoped, tag = 'internal scratch']
  #allocation2 [shape = 'f32[1]{0:T(128)S(6)}', space=smem, size = 0x200, scoped, tag = 'scoped memory for tpu_custom_call.1']
  %s0 = inlined_call_operand.<no memory space> [shape: f32[1], index: 0, kind: input, shape index: {}]
  %s1 = inlined_call_operand.vmem [shape: f32[8,128], index: 1, kind: input, shape index: {}]
  %s2 = inlined_call_operand.vmem [shape: f32[128,144], index: 2, kind: input, shape index: {}]
  %s3 = inlined_call_operand.vmem [shape: f32[144,24], index: 3, kind: input, shape index: {}]
  %s4 = inlined_call_operand.hbm [shape: f32[8,24], index: 4, kind: output, shape index: {}]
  %s5 = sld [smem:[#allocation0]]
  $region26: #{tpu_custom_call.1} parent=0
    _
  %s7 = ssub.s32 1, %s5
  %s8 = scalar_select 0, %s7, %s5
  %9 = sst [smem:[#allocation2]] %s0
  $region1: #{tpu_custom_call.1} parent=0
    #allocation3 [shape = 'u8[4096]{0}', space=vmem, size = 0x1000, scoped, tag = 'output window, operand 0, single buffered']
    #allocation4 [shape = 's32[1]{0}', space=sflag, size = 0x4, scoped, tag = 'scoped memory for tpu_custom_call.1']
    %10 = vsyncpa [#allocation4], 0
    // Predicated region
    $region2: #{tpu_custom_call.1} parent=1 // pred_check
      _
    $region3: #{tpu_custom_call.1} parent=1 // pred_check_branch
      %12 = sbr.rel (0) target = $region5
    $region4: #{tpu_custom_call.1} parent=1 // pred_region
      _
    $region5: #{tpu_custom_call.1} parent=1 // pred_fallthru
      _
    // Predicated region
    $region6: #{tpu_custom_call.1} parent=1 // pred_check
      _
    $region7: #{tpu_custom_call.1} parent=1 // pred_check_branch
      %14 = sbr.rel (0) target = $region9
    $region8: #{tpu_custom_call.1} parent=1 // pred_region
      _
    $region9: #{tpu_custom_call.1} parent=1 // pred_fallthru
      _
    // Predicated region
    $region10: #{tpu_custom_call.1} parent=1 // pred_check
      _
    $region11: #{tpu_custom_call.1} parent=1 // pred_check_branch
      %16 = sbr.rel (0) target = $region13
    $region12: #{tpu_custom_call.1} parent=1 // pred_region
      _
    $region13: #{tpu_custom_call.1} parent=1 // pred_fallthru
      _
    // Predicated region
    $region14: #{tpu_custom_call.1} parent=1 // pred_check
      _
    $region15: #{tpu_custom_call.1} parent=1 // pred_check_branch
      %18 = sbr.rel (0) target = $region17
    $region16: #{tpu_custom_call.1} parent=1 // pred_region
      _
    $region17: #{tpu_custom_call.1} parent=1 // pred_fallthru
      _
    %s19 = sld [smem:[#allocation2]]
    %v20 = vld [vmem:[%s1] sm:$0xff]
    %v21 = vstv %s19
    %v22 = vmul.f32 %v20, %v21
    %v23 = vmax.f32 %v22, 0.0
    %v24 = vld [vmem:[%s2] sm:$0xff]
    %v25 = vld [vmem:[%s2 + $0x8] sm:$0xff]
    %v26 = vld [vmem:[%s2 + $0x10] sm:$0xff]
    %v27 = vld [vmem:[%s2 + $0x18] sm:$0xff]
    %v28 = vld [vmem:[%s2 + $0x20] sm:$0xff]
    %v29 = vld [vmem:[%s2 + $0x28] sm:$0xff]
    %v30 = vld [vmem:[%s2 + $0x30] sm:$0xff]
    %v31 = vld [vmem:[%s2 + $0x38] sm:$0xff]
    %v32 = vld [vmem:[%s2 + $0x40] sm:$0xff]
    %v33 = vld [vmem:[%s2 + $0x48] sm:$0xff]
    %v34 = vld [vmem:[%s2 + $0x50] sm:$0xff]
    %v35 = vld [vmem:[%s2 + $0x58] sm:$0xff]
    %v36 = vld [vmem:[%s2 + $0x60] sm:$0xff]
    %v37 = vld [vmem:[%s2 + $0x68] sm:$0xff]
    %v38 = vld [vmem:[%s2 + $0x70] sm:$0xff]
    %v39 = vld [vmem:[%s2 + $0x78] sm:$0xff]
    %v40 = vld [vmem:[%s2 + $0x80] sm:$0xff]
    %v41 = vld [vmem:[%s2 + $0x88] sm:$0xff]
    %v42 = vld [vmem:[%s2 + $0x90] sm:$0xff]
    %v43 = vld [vmem:[%s2 + $0x98] sm:$0xff]
    %v44 = vld [vmem:[%s2 + $0xa0] sm:$0xff]
    %v45 = vld [vmem:[%s2 + $0xa8] sm:$0xff]
    %v46 = vld [vmem:[%s2 + $0xb0] sm:$0xff]
    %v47 = vld [vmem:[%s2 + $0xb8] sm:$0xff]
    %v48 = vld [vmem:[%s2 + $0xc0] sm:$0xff]
    %v49 = vld [vmem:[%s2 + $0xc8] sm:$0xff]
    %v50 = vld [vmem:[%s2 + $0xd0] sm:$0xff]
    %v51 = vld [vmem:[%s2 + $0xd8] sm:$0xff]
    %v52 = vld [vmem:[%s2 + $0xe0] sm:$0xff]
    %v53 = vld [vmem:[%s2 + $0xe8] sm:$0xff]
    %v54 = vld [vmem:[%s2 + $0xf0] sm:$0xff]
    %v55 = vld [vmem:[%s2 + $0xf8] sm:$0xff]
    %56 = vmatprep.subr.mxu0 %v25
    %57 = vmatpush1.msra.mxu0 %v24
    %58 = vmatprep.subr.mxu0 %v27
    %59 = vmatpush1.msra.mxu0 %v26
    %60 = vmatprep.subr.mxu0 %v29
    %61 = vmatpush1.msra.mxu0 %v28
    %62 = vmatprep.subr.mxu0 %v31
    %63 = vmatpush1.msra.mxu0 %v30
    %64 = vmatprep.subr.mxu0 %v33
    %65 = vmatpush1.msra.mxu0 %v32
    %66 = vmatprep.subr.mxu0 %v35
    %67 = vmatpush1.msra.mxu0 %v34
    %68 = vmatprep.subr.mxu0 %v37
    %69 = vmatpush1.msra.mxu0 %v36
    %70 = vmatprep.subr.mxu0 %v39
    %71 = vmatpush1.msra.mxu0 %v38
    %72 = vmatprep.subr.mxu0 %v41
    %73 = vmatpush1.msra.mxu0 %v40
    %74 = vmatprep.subr.mxu0 %v43
    %75 = vmatpush1.msra.mxu0 %v42
    %76 = vmatprep.subr.mxu0 %v45
    %77 = vmatpush1.msra.mxu0 %v44
    %78 = vmatprep.subr.mxu0 %v47
    %79 = vmatpush1.msra.mxu0 %v46
    %80 = vmatprep.subr.mxu0 %v49
    %81 = vmatpush1.msra.mxu0 %v48
    %82 = vmatprep.subr.mxu0 %v51
    %83 = vmatpush1.msra.mxu0 %v50
    %84 = vmatprep.subr.mxu0 %v53
    %85 = vmatpush1.msra.mxu0 %v52
    %86 = vmatprep.subr.mxu0 %v55
    %87 = vmatpush1.msra.mxu0 %v54
    %88 = vmatprep.subr.mxu0 0.0
    %89 = vmatpush1.msra.mxu0 0.0
    %90 = vmatprep.subr.mxu0 0.0
    %91 = vmatpush1.msra.mxu0 0.0
    %92 = vmatprep.subr.mxu0 0.0
    %93 = vmatpush1.msra.mxu0 0.0
    %94 = vmatprep.subr.mxu0 0.0
    %95 = vmatpush1.msra.mxu0 0.0
    %96 = vmatprep.subr.mxu0 0.0
    %97 = vmatpush1.msra.mxu0 0.0
    %98 = vmatprep.subr.mxu0 0.0
    %99 = vmatpush1.msra.mxu0 0.0
    %100 = vmatprep.subr.mxu0 0.0
    %101 = vmatpush1.msra.mxu0 0.0
    %102 = vmatprep.subr.mxu0 0.0
    %103 = vmatpush1.msra.mxu0 0.0
    %104 = vmatprep.subr.mxu0 0.0
    %105 = vmatpush1.msra.mxu0 0.0
    %106 = vmatprep.subr.mxu0 0.0
    %107 = vmatpush1.msra.mxu0 0.0
    %108 = vmatprep.subr.mxu0 0.0
    %109 = vmatpush1.msra.mxu0 0.0
    %110 = vmatprep.subr.mxu0 0.0
    %111 = vmatpush1.msra.mxu0 0.0
    %112 = vmatprep.subr.mxu0 0.0
    %113 = vmatpush1.msra.mxu0 0.0
    %114 = vmatprep.subr.mxu0 0.0
    %115 = vmatpush1.msra.mxu0 0.0
    %116 = vmatprep.subr.mxu0 0.0
    %117 = vmatpush1.msra.mxu0 0.0
    %118 = vmatprep.subr.mxu0 0.0
    %119 = vmatpush1.msra.mxu0 0.0
    %120 = vmatprep.mubr.f32.mxu0 0.0
    %121 = vmatmul.mubr.f32.gmra.mrb[0].mxu0 %v23
    %v122 = vpop.f32.mrb[0].mxu0
    %v123 = vadd.f32 0.0, %v122
    %v124 = vpop.f32.mrb[0].mxu0
    %v125 = vadd.f32 0.0, %v124
    %126 = vdwg.mxu0
    %v127 = vmax.f32 %v123, 0.0
    %v128 = vmax.f32 %v125, 0.0
    %v129 = vld [vmem:[%s3] sm:$0xff]
    %v130 = vld [vmem:[%s3 + $0x8] sm:$0xff]
    %v131 = vld [vmem:[%s3 + $0x10] sm:$0xff]
    %v132 = vld [vmem:[%s3 + $0x18] sm:$0xff]
    %v133 = vld [vmem:[%s3 + $0x20] sm:$0xff]
    %v134 = vld [vmem:[%s3 + $0x28] sm:$0xff]
    %v135 = vld [vmem:[%s3 + $0x30] sm:$0xff]
    %v136 = vld [vmem:[%s3 + $0x38] sm:$0xff]
    %v137 = vld [vmem:[%s3 + $0x40] sm:$0xff]
    %v138 = vld [vmem:[%s3 + $0x48] sm:$0xff]
    %v139 = vld [vmem:[%s3 + $0x50] sm:$0xff]
    %v140 = vld [vmem:[%s3 + $0x58] sm:$0xff]
    %v141 = vld [vmem:[%s3 + $0x60] sm:$0xff]
    %v142 = vld [vmem:[%s3 + $0x68] sm:$0xff]
    %v143 = vld [vmem:[%s3 + $0x70] sm:$0xff]
    %v144 = vld [vmem:[%s3 + $0x78] sm:$0xff]
    %v145 = vld [vmem:[%s3 + $0x80] sm:$0xff]
    %v146 = vld [vmem:[%s3 + $0x88] sm:$0xff]
    %vm147 = vcmask 130048
    %v149 = vsel %vm147, %v128, 0
    %151 = vmatprep.subr.mxu0 0.0
    %152 = vmatpush1.msra.mxu0 %v129
    %153 = vmatprep.subr.mxu0 0.0
    %154 = vmatpush1.msra.mxu0 %v130
    %155 = vmatprep.subr.mxu0 0.0
    %156 = vmatpush1.msra.mxu0 %v131
    %157 = vmatprep.subr.mxu0 0.0
    %158 = vmatpush1.msra.mxu0 %v132
    %159 = vmatprep.subr.mxu0 0.0
    %160 = vmatpush1.msra.mxu0 %v133
    %161 = vmatprep.subr.mxu0 0.0
    %162 = vmatpush1.msra.mxu0 %v134
    %163 = vmatprep.subr.mxu0 0.0
    %164 = vmatpush1.msra.mxu0 %v135
    %165 = vmatprep.subr.mxu0 0.0
    %166 = vmatpush1.msra.mxu0 %v136
    %167 = vmatprep.subr.mxu0 0.0
    %168 = vmatpush1.msra.mxu0 %v137
    %169 = vmatprep.subr.mxu0 0.0
    %170 = vmatpush1.msra.mxu0 %v138
    %171 = vmatprep.subr.mxu0 0.0
    %172 = vmatpush1.msra.mxu0 %v139
    %173 = vmatprep.subr.mxu0 0.0
    %174 = vmatpush1.msra.mxu0 %v140
    %175 = vmatprep.subr.mxu0 0.0
    %176 = vmatpush1.msra.mxu0 %v141
    %177 = vmatprep.subr.mxu0 0.0
    %178 = vmatpush1.msra.mxu0 %v142
    %179 = vmatprep.subr.mxu0 0.0
    %180 = vmatpush1.msra.mxu0 %v143
    %181 = vmatprep.subr.mxu0 0.0
    %182 = vmatpush1.msra.mxu0 %v144
    %183 = vmatprep.subr.mxu0 0.0
    %184 = vmatpush1.msra.mxu0 %v145
    %185 = vmatprep.subr.mxu0 0.0
    %186 = vmatpush1.msra.mxu0 %v146
    %187 = vmatprep.subr.mxu0 0.0
    %188 = vmatpush1.msra.mxu0 0.0
    %189 = vmatprep.subr.mxu0 0.0
    %190 = vmatpush1.msra.mxu0 0.0
    %191 = vmatprep.subr.mxu0 0.0
    %192 = vmatpush1.msra.mxu0 0.0
    %193 = vmatprep.subr.mxu0 0.0
    %194 = vmatpush1.msra.mxu0 0.0
    %195 = vmatprep.subr.mxu0 0.0
    %196 = vmatpush1.msra.mxu0 0.0
    %197 = vmatprep.subr.mxu0 0.0
    %198 = vmatpush1.msra.mxu0 0.0
    %199 = vmatprep.subr.mxu0 0.0
    %200 = vmatpush1.msra.mxu0 0.0
    %201 = vmatprep.subr.mxu0 0.0
    %202 = vmatpush1.msra.mxu0 0.0
    %203 = vmatprep.subr.mxu0 0.0
    %204 = vmatpush1.msra.mxu0 0.0
    %205 = vmatprep.subr.mxu0 0.0
    %206 = vmatpush1.msra.mxu0 0.0
    %207 = vmatprep.subr.mxu0 0.0
    %208 = vmatpush1.msra.mxu0 0.0
    %209 = vmatprep.subr.mxu0 0.0
    %210 = vmatpush1.msra.mxu0 0.0
    %211 = vmatprep.subr.mxu0 0.0
    %212 = vmatpush1.msra.mxu0 0.0
    %213 = vmatprep.subr.mxu0 0.0
    %214 = vmatpush1.msra.mxu0 0.0
    %215 = vmatprep.mubr.f32.mxu0 %v149
    %216 = vmatmul.mubr.f32.gmra.mrb[0].mxu0 %v127
    %v217 = vpop.f32.mrb[0].mxu0
    %v218 = vadd.f32 0.0, %v217
    %v219 = vpop.f32.mrb[0].mxu0
    %220 = vdwg.mxu0
    %v221 = vmax.f32 %v218, 0.0
    %vm222 = vcmask 195584
    %223 = vst.msk [vmem:[#allocation3] sm:$0xff] %vm222, %v221
    // Predicated region
    $region18: #{tpu_custom_call.1} parent=1 // pred_check
      _
    $region19: #{tpu_custom_call.1} parent=1 // pred_check_branch
      %225 = sbr.rel (0) target = $region21
    $region20: #{tpu_custom_call.1} parent=1 // pred_region
      %s227 = ssub.s32 128, 128
      %228 = vsyncadd [#allocation4], %s227
      %s230 = sshll.u32 [#allocation3], 4
      %s231 = int_to_ptr.vmem [resolvable:$true] %s230
      %233 = dma.vmem_to_hbm [thread:$0]  %s231, 128, %s4, [#allocation4]
    $region21: #{tpu_custom_call.1} parent=1 // pred_fallthru
      _
    // Predicated region
    $region22: #{tpu_custom_call.1} parent=1 // pred_check
      _
    $region23: #{tpu_custom_call.1} parent=1 // pred_check_branch
      %235 = sbr.rel (0) target = $region25
    $region24: #{tpu_custom_call.1} parent=1 // pred_region
      %236 = dma.done [#allocation4], 128
    $region25: #{tpu_custom_call.1} parent=1 // pred_fallthru
      _
    %237 = vsyncpa [#allocation4], 1

</llo_original>
